<compile_context>
chip_gen: v5e
topology: v5e:2x2
jax: 0.10.0
libtpu: 0.0.40
codegen_flags: <defaults>
</compile_context>

<pallas_src>
import jax
import jax.numpy as jnp
from jax.experimental import pallas as pl
from jax.experimental.pallas import tpu as pltpu


def _eca_kernel(w_ref, x_ref, o_ref):
    # w_ref: (k,)      f32 in SMEM -- Conv1d(1, 1, k, bias=False) weights.
    # x_ref: (Bt,C,L)  VMEM        -- Bt batch elements, lane-dense spatial dim.
    # o_ref: (Bt,C,L)  VMEM
    Bt, C, L = x_ref.shape
    k = w_ref.shape[0]
    pad = (k - 1) // 2

    # 1) AdaptiveAvgPool2d(1): per-channel spatial mean (lane reduction), f32 acc.
    #    No persistent f32 copy of the tile is kept.
    y = jnp.sum(x_ref[...].astype(jnp.float32), axis=-1, keepdims=True) * (1.0 / L)
    # y: (Bt, C, 1)

    # 2) Conv1d over channels with zero ("same") padding as a k-tap roll + mask
    #    weighted sum:  z[b, i] = sum_j w[j] * y[b, i + j - pad]  (0 outside [0,C)).
    idx = jax.lax.broadcasted_iota(jnp.int32, (Bt, C, 1), 1)      # channel index
    z = jnp.zeros((Bt, C, 1), jnp.float32)
    for j in range(k):                                            # k is small & static
        d = j - pad
        shifted = pltpu.roll(y, shift=(-d) % C, axis=1)           # shifted[i] = y[i + d]
        valid = jnp.logical_and(idx + d >= 0, idx + d < C)        # zero the wrap-around
        z = z + w_ref[j] * jnp.where(valid, shifted, 0.0)

    # 3) Sigmoid gate (EUP), 4) channel-wise rescale (lane broadcast, in out dtype).
    gate = jax.nn.sigmoid(z).astype(o_ref.dtype)                  # (Bt, C, 1)
    o_ref[...] = x_ref[...] * gate


def _pick_batch_tile(B, C, L, itemsize, buffer_budget_bytes):
    """Largest divisor Bt of B whose 2(in)+2(out) double buffers fit the budget,
    keeping >= 2 grid steps when B >= 2 (megacore on v7x)."""
    lpad = ((L + 127) // 128) * 128          # lane padding of the last dim
    cpad = ((C + 7) // 8) * 8                # sublane padding of the channel dim
    per_batch = cpad * lpad * itemsize
    max_bt = max(1, int(buffer_budget_bytes // (4 * per_batch)))
    bt = 1
    for d in range(1, B + 1):
        if B % d != 0 or d > max_bt:
            continue
        if B >= 2 and B // d < 2:
            continue                         # keep at least 2 grid steps
        bt = d
    return bt


def eca_layer(x, conv_weight):
    """ECA forward. x: (B, C, H, W); conv_weight: Conv1d weight (1, 1, k) or (k,)."""
    B, C, H, W = x.shape
    L = H * W
    w = jnp.asarray(conv_weight, jnp.float32).reshape(-1)   # (k,)
    k = int(w.shape[0])

    # Metadata-only reshape: lane-dense last dim for the kernel.
    x2 = x.reshape(B, C, L)

    itemsize = jnp.dtype(x.dtype).itemsize
    vmem_limit = 32 * 1024 * 1024                      # safe on v5e/v6e/v7x
    bt = _pick_batch_tile(B, C, L, itemsize, vmem_limit // 2)
    grid = (B // bt,)

    cost = pl.CostEstimate(
        flops=2 * B * C * L + 2 * k * B * C,           # mean + rescale + tiny conv
        transcendentals=B * C,                         # sigmoid
        bytes_accessed=2 * B * C * L * itemsize + k * 4,
    )

    out2 = pl.pallas_call(
        _eca_kernel,
        out_shape=jax.ShapeDtypeStruct((B, C, L), x.dtype),
        grid=grid,
        in_specs=[
            pl.BlockSpec(memory_space=pltpu.MemorySpace.SMEM),   # conv weights
            pl.BlockSpec((bt, C, L), lambda b: (b, 0, 0)),       # x, bt batches / step
        ],
        out_specs=pl.BlockSpec((bt, C, L), lambda b: (b, 0, 0)),
        compiler_params=pltpu.CompilerParams(
            dimension_semantics=("parallel",),
            vmem_limit_bytes=vmem_limit,
        ),
        cost_estimate=cost,
    )(w, x2)

    return out2.reshape(B, C, H, W)


def eca_layer_ref(x, conv_weight):
    """Pure-JAX reference mirroring the PyTorch forward exactly."""
    B, C, H, W = x.shape
    w = jnp.asarray(conv_weight, jnp.float32).reshape(-1)
    k = w.shape[0]
    pad = (k - 1) // 2
    xf = x.astype(jnp.float32)
    y = jnp.mean(xf, axis=(2, 3))                          # (B, C)
    ypad = jnp.pad(y, ((0, 0), (pad, pad)))
    z = jnp.zeros_like(y)
    for j in range(k):
        z = z + w[j] * jax.lax.slice_in_dim(ypad, j, j + C, axis=1)
    gate = jax.nn.sigmoid(z)[:, :, None, None]
    return (xf * gate).astype(x.dtype)


if __name__ == "__main__":
    B, C, H, W = 2, 16, 16, 16
    k_size = 3

    key = jax.random.PRNGKey(0)
    kx, kw = jax.random.split(key)
    x = jax.random.normal(kx, (B, C, H, W), dtype=jnp.float32)
    # Conv1d(1, 1, k_size, bias=False) weight, shape (out=1, in=1, k_size).
    conv_w = 0.5 * jax.random.normal(kw, (1, 1, k_size), dtype=jnp.float32)

    out = eca_layer(x, conv_w)
    out = jax.block_until_ready(out)

    ref = eca_layer_ref(x, conv_w)
    assert out.shape == (B, C, H, W), out.shape
    max_err = float(jnp.max(jnp.abs(out - ref)))
    assert jnp.allclose(out, ref, atol=1e-4, rtol=1e-4), f"mismatch vs reference: {max_err}"

    print("KERNEL_OK")
</pallas_src>

<mosaic_0001>
module attributes {stable_mosaic.version = 11 : i64} {
  func.func @_eca_kernel(%arg0: i32, %arg1: memref<3xf32, #tpu.memory_space<smem>>, %arg2: memref<1x16x256xf32, #tpu.memory_space<vmem>>, %arg3: memref<1x16x256xf32, #tpu.memory_space<vmem>>) attributes {dimension_semantics = [#tpu.dimension_semantics<parallel>], iteration_bounds = array<i64: 2>, scalar_prefetch = 0 : i64, scratch_operands = 0 : i64, tpu.core_type = #tpu.core_type<tc>, window_params = [{transform_indices = @transform_0, window_bounds = array<i64: 3>}, {transform_indices = @transform_1, window_bounds = array<i64: 1, 16, 256>}, {transform_indices = @transform_2, window_bounds = array<i64: 1, 16, 256>}]} {
    %c0 = arith.constant 0 : index
    %c0_0 = arith.constant 0 : index
    %c0_1 = arith.constant 0 : index
    %0 = vector.load %arg2[%c0, %c0_0, %c0_1] : memref<1x16x256xf32, #tpu.memory_space<vmem>>, vector<1x16x256xf32>
    %cst = arith.constant dense<0.000000e+00> : vector<1x16xf32>
    %1 = vector.multi_reduction <add>, %0, %cst [2] : vector<1x16x256xf32> to vector<1x16xf32>
    %2 = vector.shape_cast %1 : vector<1x16xf32> to vector<1x16x1xf32>
    %cst_2 = arith.constant 3.906250e-03 : f32
    %3 = vector.broadcast %cst_2 : f32 to vector<1x16x1xf32>
    %4 = arith.mulf %2, %3 : vector<1x16x1xf32>
    %5 = tpu.iota {dimensions = array<i32: 1>} : vector<1x16x1xi32>
    %cst_3 = arith.constant 0.000000e+00 : f32
    %6 = vector.broadcast %cst_3 : f32 to vector<1x16x1xf32>
    %c1_i32 = arith.constant 1 : i32
    %7 = tpu.dynamic_rotate %4 by %c1_i32 dim 1 : vector<1x16x1xf32>, i32 -> vector<1x16x1xf32>
    %c-1_i32 = arith.constant -1 : i32
    %8 = vector.broadcast %c-1_i32 : i32 to vector<1x16x1xi32>
    %9 = arith.addi %5, %8 : vector<1x16x1xi32>
    %c0_i32 = arith.constant 0 : i32
    %10 = vector.broadcast %c0_i32 : i32 to vector<1x16x1xi32>
    %11 = arith.cmpi sge, %9, %10 : vector<1x16x1xi32>
    %c-1_i32_4 = arith.constant -1 : i32
    %12 = vector.broadcast %c-1_i32_4 : i32 to vector<1x16x1xi32>
    %13 = arith.addi %5, %12 : vector<1x16x1xi32>
    %c16_i32 = arith.constant 16 : i32
    %14 = vector.broadcast %c16_i32 : i32 to vector<1x16x1xi32>
    %15 = arith.cmpi slt, %13, %14 : vector<1x16x1xi32>
    %16 = arith.andi %11, %15 : vector<1x16x1xi1>
    %c0_5 = arith.constant 0 : index
    %17 = memref.load %arg1[%c0_5] : memref<3xf32, #tpu.memory_space<smem>>
    %cst_6 = arith.constant 0.000000e+00 : f32
    %18 = vector.broadcast %cst_6 : f32 to vector<1x16x1xf32>
    %19 = arith.select %16, %7, %18 : vector<1x16x1xi1>, vector<1x16x1xf32>
    %20 = vector.broadcast %17 : f32 to vector<1x16x1xf32>
    %21 = arith.mulf %20, %19 : vector<1x16x1xf32>
    %22 = arith.addf %6, %21 : vector<1x16x1xf32>
    %c0_i32_7 = arith.constant 0 : i32
    %23 = tpu.dynamic_rotate %4 by %c0_i32_7 dim 1 : vector<1x16x1xf32>, i32 -> vector<1x16x1xf32>
    %c0_i32_8 = arith.constant 0 : i32
    %24 = vector.broadcast %c0_i32_8 : i32 to vector<1x16x1xi32>
    %25 = arith.addi %5, %24 : vector<1x16x1xi32>
    %c0_i32_9 = arith.constant 0 : i32
    %26 = vector.broadcast %c0_i32_9 : i32 to vector<1x16x1xi32>
    %27 = arith.cmpi sge, %25, %26 : vector<1x16x1xi32>
    %c0_i32_10 = arith.constant 0 : i32
    %28 = vector.broadcast %c0_i32_10 : i32 to vector<1x16x1xi32>
    %29 = arith.addi %5, %28 : vector<1x16x1xi32>
    %c16_i32_11 = arith.constant 16 : i32
    %30 = vector.broadcast %c16_i32_11 : i32 to vector<1x16x1xi32>
    %31 = arith.cmpi slt, %29, %30 : vector<1x16x1xi32>
    %32 = arith.andi %27, %31 : vector<1x16x1xi1>
    %c1 = arith.constant 1 : index
    %33 = memref.load %arg1[%c1] : memref<3xf32, #tpu.memory_space<smem>>
    %cst_12 = arith.constant 0.000000e+00 : f32
    %34 = vector.broadcast %cst_12 : f32 to vector<1x16x1xf32>
    %35 = arith.select %32, %23, %34 : vector<1x16x1xi1>, vector<1x16x1xf32>
    %36 = vector.broadcast %33 : f32 to vector<1x16x1xf32>
    %37 = arith.mulf %36, %35 : vector<1x16x1xf32>
    %38 = arith.addf %22, %37 : vector<1x16x1xf32>
    %c15_i32 = arith.constant 15 : i32
    %39 = tpu.dynamic_rotate %4 by %c15_i32 dim 1 : vector<1x16x1xf32>, i32 -> vector<1x16x1xf32>
    %c1_i32_13 = arith.constant 1 : i32
    %40 = vector.broadcast %c1_i32_13 : i32 to vector<1x16x1xi32>
    %41 = arith.addi %5, %40 : vector<1x16x1xi32>
    %c0_i32_14 = arith.constant 0 : i32
    %42 = vector.broadcast %c0_i32_14 : i32 to vector<1x16x1xi32>
    %43 = arith.cmpi sge, %41, %42 : vector<1x16x1xi32>
    %c1_i32_15 = arith.constant 1 : i32
    %44 = vector.broadcast %c1_i32_15 : i32 to vector<1x16x1xi32>
    %45 = arith.addi %5, %44 : vector<1x16x1xi32>
    %c16_i32_16 = arith.constant 16 : i32
    %46 = vector.broadcast %c16_i32_16 : i32 to vector<1x16x1xi32>
    %47 = arith.cmpi slt, %45, %46 : vector<1x16x1xi32>
    %48 = arith.andi %43, %47 : vector<1x16x1xi1>
    %c2 = arith.constant 2 : index
    %49 = memref.load %arg1[%c2] : memref<3xf32, #tpu.memory_space<smem>>
    %cst_17 = arith.constant 0.000000e+00 : f32
    %50 = vector.broadcast %cst_17 : f32 to vector<1x16x1xf32>
    %51 = arith.select %48, %39, %50 : vector<1x16x1xi1>, vector<1x16x1xf32>
    %52 = vector.broadcast %49 : f32 to vector<1x16x1xf32>
    %53 = arith.mulf %52, %51 : vector<1x16x1xf32>
    %54 = arith.addf %38, %53 : vector<1x16x1xf32>
    %55 = arith.negf %54 : vector<1x16x1xf32>
    %56 = math.exp %55 : vector<1x16x1xf32>
    %cst_18 = arith.constant 1.000000e+00 : f32
    %57 = vector.broadcast %cst_18 : f32 to vector<1x16x1xf32>
    %58 = arith.addf %57, %56 : vector<1x16x1xf32>
    %59 = arith.divf %57, %58 : vector<1x16x1xf32>
    %c0_19 = arith.constant 0 : index
    %c0_20 = arith.constant 0 : index
    %c0_21 = arith.constant 0 : index
    %60 = vector.load %arg2[%c0_19, %c0_20, %c0_21] : memref<1x16x256xf32, #tpu.memory_space<vmem>>, vector<1x16x256xf32>
    %61 = vector.broadcast %59 : vector<1x16x1xf32> to vector<1x16x256xf32>
    %62 = arith.mulf %60, %61 : vector<1x16x256xf32>
    %c0_22 = arith.constant 0 : index
    %c0_23 = arith.constant 0 : index
    %c0_24 = arith.constant 0 : index
    %63 = vector.load %arg3[%c0_22, %c0_23, %c0_24] : memref<1x16x256xf32, #tpu.memory_space<vmem>>, vector<1x16x256xf32>
    tpu.vector_store %arg3[%c0_22, %c0_23, %c0_24], %62 {strides = array<i32>} : memref<1x16x256xf32, #tpu.memory_space<vmem>>, vector<1x16x256xf32>,
    return
  }
  func.func @transform_0(%arg0: i32) -> i32 {
    %c0_i32 = arith.constant 0 : i32
    %c0_i32_0 = arith.constant 0 : i32
    return %c0_i32 : i32
  }
  func.func @transform_1(%arg0: i32) -> (i32, i32, i32) {
    %c0_i32 = arith.constant 0 : i32
    %c0_i32_0 = arith.constant 0 : i32
    %c0_i32_1 = arith.constant 0 : i32
    return %arg0, %c0_i32, %c0_i32_0 : i32, i32, i32
  }
  func.func @transform_2(%arg0: i32) -> (i32, i32, i32) {
    %c0_i32 = arith.constant 0 : i32
    %c0_i32_0 = arith.constant 0 : i32
    %c0_i32_1 = arith.constant 0 : i32
    return %arg0, %c0_i32, %c0_i32_0 : i32, i32, i32
  }
}

</mosaic_0001>

<llo_original>
// kernel: tpu_custom_call.1
$region0: #{tpu_custom_call.1}
  #allocation0 [shape = 'u32[]', space=smem, size = 0x4, offset = 0x4, fixed_abs, tag = 'smem constant byte address 0x4 - core index']
  #allocation1 [shape = 'u32[72,128]{1,0:T(1,128)}', space=vmem, size = 0x9000, scoped, tag = 'internal scratch']
  %s0 = inlined_call_operand.hbm [shape: f32[3], index: 0, kind: input, shape index: {}]
  %s1 = inlined_call_operand.hbm [shape: f32[2,16,256], index: 1, kind: input, shape index: {}]
  %s2 = inlined_call_operand.hbm [shape: f32[2,16,256], index: 2, kind: output, shape index: {}]
  %s3 = sld [smem:[#allocation0]]
  $region49: #{tpu_custom_call.1} parent=0
    _
  %s5 = ssub.s32 1, %s3
  %s6 = scalar_select 0, %s5, %s3
  $region1: #{tpu_custom_call.1} parent=0
    #allocation2 [shape = 'u8[512]{0}', space=smem, size = 0x200, scoped, tag = 'input window, operand 0, single buffered']
    #allocation3 [shape = 's32[2]{0}', space=sflag, size = 0x8, scoped, tag = 'scoped memory for tpu_custom_call.1']
    #allocation4 [shape = 's32[2]{0}', space=sflag, size = 0x8, scoped, tag = 'scoped memory for tpu_custom_call.1']
    #allocation5 [shape = 's32[2]{0}', space=sflag, size = 0x8, scoped, tag = 'scoped memory for tpu_custom_call.1']
    #allocation6 [shape = 'u8[32768]{0}', space=vmem, size = 0x8000, scoped, tag = 'input window, operand 1']
    #allocation7 [shape = 'u8[32768]{0}', space=vmem, size = 0x8000, scoped, tag = 'output window, operand 0']
    %7 = vsyncpa [#allocation5], 0
    %8 = vsyncpa [#allocation3], 0
    %s9 = scalar_lea.sflag [#allocation3], 1
    %10 = vsyncpa %s9, 0
    %11 = vsyncpa [#allocation4], 0
    %s12 = scalar_lea.sflag [#allocation4], 1
    %13 = vsyncpa %s12, 0
    loop: start=0, step=1, limit=4
    $region2: #{tpu_custom_call.1} parent=1 // loop_pre_header
      _
    $region3: #{tpu_custom_call.1} parent=1 // loop_header
      %s15 = sphi 0, %s19
      %p16 = scmp.ge.s32.totalorder %s15, 4
      %s23 = sphi 0, %s23
      %s25 = sphi 0, %s23
      %s26 = sphi 0, %s25
      %s40 = sphi 0, %s26
      %s46 = sphi 0, %s48
      %s49 = sphi 0, %s46
      %s50 = sphi 0, %s49
      %s66 = sphi 0, %s50
      %s72 = sphi 0, %s74
      %s75 = sphi 0, %s72
      %s76 = sphi 0, %s75
      %s92 = sphi 0, %s76
    $region4: #{tpu_custom_call.1} parent=1 // loop_header_branch
      %18 = sbr.rel (%p16) target = $region8
    $region5: #{tpu_custom_call.1} parent=1 // loop_body
      %s20 = ssub.s32 %s15, 1
      %s21 = ssub.s32 %s15, 2
      %s22 = sadd.s32 %s15, 1
      %s24 = sadd.s32 %s23, 1
      %p27 = scmp.eq.s32.totalorder %s15, 1
      %p28 = scmp.ne.s32.totalorder %s23, %s25
      %p29 = scmp.eq.s32.totalorder %s15, 0
      %p30 = por %p28, %p29
      %p31 = scmp.ne.s32.totalorder %s23, %s25
      %p32 = scmp.eq.s32.totalorder %s20, 1
      %p33 = por %p31, %p32
      %p34 = scmp.ne.s32.totalorder %s25, %s26
      %p35 = scmp.eq.s32.totalorder %s20, 0
      %p36 = por %p34, %p35
      %p37 = scmp.ne.s32.totalorder %s25, %s26
      %p38 = scmp.eq.s32.totalorder %s21, 1
      %p39 = por %p37, %p38
      %p41 = scmp.ne.s32.totalorder %s26, %s40
      %p42 = scmp.eq.s32.totalorder %s21, 0
      %p43 = por %p41, %p42
      %s44 = ssub.s32 %s15, %s22
      %p45 = scmp.eq.s32.totalorder %s44, 0
      %s47 = sadd.s32 %s46, 1
      %s48 = scalar_select %p45, %s46, %s47
      %p51 = pneg %p45
      %p52 = scmp.eq.s32.totalorder %s15, 1
      %p53 = por %p51, %p52
      %p54 = scmp.ne.s32.totalorder %s46, %s49
      %p55 = scmp.eq.s32.totalorder %s15, 0
      %p56 = por %p54, %p55
      %p57 = scmp.ne.s32.totalorder %s46, %s49
      %p58 = scmp.eq.s32.totalorder %s20, 1
      %p59 = por %p57, %p58
      %p60 = scmp.ne.s32.totalorder %s49, %s50
      %p61 = scmp.eq.s32.totalorder %s20, 0
      %p62 = por %p60, %p61
      %p63 = scmp.ne.s32.totalorder %s49, %s50
      %p64 = scmp.eq.s32.totalorder %s21, 1
      %p65 = por %p63, %p64
      %p67 = scmp.ne.s32.totalorder %s50, %s66
      %p68 = scmp.eq.s32.totalorder %s21, 0
      %p69 = por %p67, %p68
      %s70 = ssub.s32 %s15, %s22
      %p71 = scmp.eq.s32.totalorder %s70, 0
      %s73 = sadd.s32 %s72, 1
      %s74 = scalar_select %p71, %s72, %s73
      %p77 = pneg %p71
      %p78 = scmp.eq.s32.totalorder %s15, 1
      %p79 = por %p77, %p78
      %p80 = scmp.ne.s32.totalorder %s72, %s75
      %p81 = scmp.eq.s32.totalorder %s15, 0
      %p82 = por %p80, %p81
      %p83 = scmp.ne.s32.totalorder %s72, %s75
      %p84 = scmp.eq.s32.totalorder %s20, 1
      %p85 = por %p83, %p84
      %p86 = scmp.ne.s32.totalorder %s75, %s76
      %p87 = scmp.eq.s32.totalorder %s20, 0
      %p88 = por %p86, %p87
      %p89 = scmp.ne.s32.totalorder %s75, %s76
      %p90 = scmp.eq.s32.totalorder %s21, 1
      %p91 = por %p89, %p90
      %p93 = scmp.ne.s32.totalorder %s76, %s92
      %p94 = scmp.eq.s32.totalorder %s21, 0
      %p95 = por %p93, %p94
      %p96 = scmp.le.s32.totalorder 1, %s15
      %p97 = scmp.lt.s32.totalorder %s15, 3
      %p98 = pnand %p96, %p97
      %p99 = pneg %p98
      // Predicated region
      $region9: #{tpu_custom_call.1} parent=5 // pred_check
        _
      $region10: #{tpu_custom_call.1} parent=5 // pred_check_branch
        %101 = sbr.rel (%p98) target = $region12
      $region11: #{tpu_custom_call.1} parent=5 // pred_region
        %s102 = ssub.s32 %s15, 1
        // Predicated region
        $region13: #{tpu_custom_call.1} parent=11 // pred_check
          %p103 = pneg %p36
        $region14: #{tpu_custom_call.1} parent=11 // pred_check_branch
          %105 = sbr.rel (%p103) target = $region16
        $region15: #{tpu_custom_call.1} parent=11 // pred_region
          %107 = vsyncadd [#allocation5], 0
          %s109 = sshll.u32 %s0, 4
          %s110 = int_to_ptr.hbm [resolvable:$true] %s109
          %112 = dma.hbm_to_smem %s110, 16, [#allocation2], [#allocation5]
        $region16: #{tpu_custom_call.1} parent=11 // pred_fallthru
          _
      $region12: #{tpu_custom_call.1} parent=5 // pred_fallthru
        _
      %p113 = scmp.lt.s32.totalorder %s15, 2
      // Predicated region
      $region17: #{tpu_custom_call.1} parent=5 // pred_check
        %p114 = pneg %p113
      $region18: #{tpu_custom_call.1} parent=5 // pred_check_branch
        %116 = sbr.rel (%p114) target = $region20
      $region19: #{tpu_custom_call.1} parent=5 // pred_region
        // Predicated region
        $region21: #{tpu_custom_call.1} parent=19 // pred_check
          %p117 = pneg %p56
        $region22: #{tpu_custom_call.1} parent=19 // pred_check_branch
          %119 = sbr.rel (%p117) target = $region24
        $region23: #{tpu_custom_call.1} parent=19 // pred_region
          %s120 = sand.u32 %s46, 1
          %s121 = scalar_lea.sflag [#allocation3], %s120
          %s122 = sand.u32 %s46, 1
          %s123 = smul.addr %s122, 32
          %s124 = scalar_lea.vmem [#allocation6], %s123
          %126 = vsyncadd %s121, 0
          %s127 = smul.addr %s15, 4
          %s128 = smul.addr %s127, 8
          %s129 = scalar_lea.hbm %s1, %s128
          %s130 = sshll.u32 %s129, 4
          %s131 = int_to_ptr.hbm [resolvable:$true] %s130
          %s132 = sshll.u32 %s124, 4
          %s133 = int_to_ptr.vmem [resolvable:$true] %s132
          %138 = dma.hbm_to_vmem [thread:$0]  %s131, 512, %s133, %s121, 256, 256, 16
        $region24: #{tpu_custom_call.1} parent=19 // pred_fallthru
          _
      $region20: #{tpu_custom_call.1} parent=5 // pred_fallthru
        _
      %p139 = scmp.le.s32.totalorder 1, %s15
      %p140 = scmp.lt.s32.totalorder %s15, 3
      %p141 = pnand %p139, %p140
      %p142 = pneg %p141
      // Predicated region
      $region25: #{tpu_custom_call.1} parent=5 // pred_check
        _
      $region26: #{tpu_custom_call.1} parent=5 // pred_check_branch
        %144 = sbr.rel (%p141) target = $region28
      $region27: #{tpu_custom_call.1} parent=5 // pred_region
        %s145 = ssub.s32 %s15, 1
        // Predicated region
        $region29: #{tpu_custom_call.1} parent=27 // pred_check
          %p146 = pneg %p36
        $region30: #{tpu_custom_call.1} parent=27 // pred_check_branch
          %148 = sbr.rel (%p146) target = $region32
        $region31: #{tpu_custom_call.1} parent=27 // pred_region
          %150 = dma.done [#allocation5], 16
        $region32: #{tpu_custom_call.1} parent=27 // pred_fallthru
          _
        %s151 = sand.u32 %s49, 1
        %s152 = scalar_lea.sflag [#allocation3], %s151
        %s153 = sand.u32 %s49, 1
        %s154 = smul.addr %s153, 32
        %s155 = scalar_lea.vmem [#allocation6], %s154
        // Predicated region
        $region33: #{tpu_custom_call.1} parent=27 // pred_check
          %p156 = pneg %p62
        $region34: #{tpu_custom_call.1} parent=27 // pred_check_branch
          %158 = sbr.rel (%p156) target = $region36
        $region35: #{tpu_custom_call.1} parent=27 // pred_region
          %160 = dma.done %s152, 512
        $region36: #{tpu_custom_call.1} parent=27 // pred_fallthru
          _
        %161 = sfence
        %p162 = pneg %p36
        %p163 = pneg %p33
        %s164 = sand.u32 %s49, 1
        %s165 = scalar_lea.sflag [#allocation3], %s164
        %s166 = sand.u32 %s49, 1
        %s167 = smul.addr %s166, 32
        %s168 = scalar_lea.vmem [#allocation6], %s167
        %p169 = pneg %p62
        %p170 = pneg %p59
        %p171 = pneg %p88
        %p172 = pneg %p85
        %s173 = sand.u32 %s75, 1
        %s174 = scalar_lea.sflag [#allocation4], %s173
        %s175 = sand.u32 %s75, 1
        %s176 = smul.addr %s175, 32
        %s177 = scalar_lea.vmem [#allocation7], %s176
        %v178 = vld [vmem:[%s155] sm:$0xff]
        %v179 = vld [vmem:[%s155 + $0x8] sm:$0xff]
        %v180 = vld [vmem:[%s155 + $0x10] sm:$0xff]
        %v181 = vld [vmem:[%s155 + $0x18] sm:$0xff]
        %v182 = vadd.f32 %v178, %v179
        %183 = vadd.xlane.f32.xlu0 %v182
        %v184 = vpop.xlane.xlu0 %183
        %v185 = vadd.f32 %v180, %v181
        %186 = vadd.xlane.f32.xlu0 %v185
        %v187 = vpop.xlane.xlu0 %186
        %v188 = vmul.f32 %v184, 0.00390625
        %v189 = vmul.f32 %v187, 0.00390625
        %v190 = vlaneseq
        %v191 = vshrl.u32 %v190, 7
        %v192 = vadd.s32 %v191, 8
        %v193 = vrot.slane %v188, 7
        %v194 = vrot.slane %v189, 7
        %vm195 = vcmp.lt.s32.totalorder %v191, 1
        %v196 = vsel %vm195, %v193, %v194
        %v197 = vsel %vm195, %v194, %v193
        %v198 = vadd.s32 %v191, 4294967295
        %v199 = vadd.s32 %v192, 4294967295
        %vm200 = vcmp.ge.s32.totalorder %v198, 0
        %vm201 = vcmp.ge.s32.totalorder %v199, 0
        %vm202 = vcmp.lt.s32.totalorder %v198, 16
        %vm203 = vcmp.lt.s32.totalorder %v199, 16
        %vm204 = vmand %vm200, %vm202
        %vm205 = vmand %vm201, %vm203
        %s206 = sld [smem:[#allocation2]]
        %v207 = vsel %vm204, %v197, 0.0
        %v208 = vsel %vm205, %v196, 0.0
        %v209 = vstv %s206
        %v210 = vmul.f32 %v209, %v207
        %v211 = vmul.f32 %v209, %v208
        %v212 = vadd.f32 %v210, 0.0
        %v213 = vadd.f32 %v211, 0.0
        %vm214 = vcmp.ge.s32.totalorder %v191, 0
        %vm215 = vcmp.ge.s32.totalorder %v192, 0
        %vm216 = vcmp.lt.s32.totalorder %v191, 16
        %vm217 = vcmp.lt.s32.totalorder %v192, 16
        %vm218 = vmand %vm214, %vm216
        %vm219 = vmand %vm215, %vm217
        %s220 = sld [smem:[#allocation2 + $0x1]]
        %v221 = vsel %vm218, %v188, 0.0
        %v222 = vsel %vm219, %v189, 0.0
        %v223 = vstv %s220
        %v224 = vmul.f32 %v223, %v221
        %v225 = vmul.f32 %v223, %v222
        %v226 = vadd.f32 %v212, %v224
        %v227 = vadd.f32 %v213, %v225
        %v228 = vrot.slane %v188, 1
        %v229 = vrot.slane %v189, 1
        %vm230 = vcmp.lt.s32.totalorder %v191, 7
        %v231 = vsel %vm230, %v228, %v229
        %v232 = vsel %vm230, %v229, %v228
        %v233 = vadd.s32 %v191, 1
        %v234 = vadd.s32 %v192, 1
        %vm235 = vcmp.ge.s32.totalorder %v233, 0
        %vm236 = vcmp.ge.s32.totalorder %v234, 0
        %vm237 = vcmp.lt.s32.totalorder %v233, 16
        %vm238 = vcmp.lt.s32.totalorder %v234, 16
        %vm239 = vmand %vm235, %vm237
        %vm240 = vmand %vm236, %vm238
        %s241 = sld [smem:[#allocation2 + $0x2]]
        %v242 = vsel %vm239, %v231, 0.0
        %v243 = vsel %vm240, %v232, 0.0
        %v244 = vstv %s241
        %v245 = vmul.f32 %v244, %v242
        %v246 = vmul.f32 %v244, %v243
        %v247 = vadd.f32 %v226, %v245
        %v248 = vadd.f32 %v227, %v246
        %v249 = vxor.u32 %v247, 2147483648
        %v250 = vxor.u32 %v248, 2147483648
        %v251 = vmul.f32 %v249, 1.442695
        %v252 = vpow.pop %v251
        %v253 = vmul.f32 %v250, 1.442695
        %v254 = vpow.pop %v253
        %v255 = vadd.f32 %v252, 1.0
        %v256 = vadd.f32 %v254, 1.0
        %v257 = vrcp.pop %v255
        %v258 = vmul.f32 %v255, %v257
        %v259 = vsub.f32 1.0, %v258
        %v260 = vmul.f32 %v257, %v259
        %v261 = vadd.f32 %v257, %v260
        %vm262 = vweird.f32 %v255
        %vm263 = vweird.f32 %v257
        %vm264 = vmor %vm262, %vm263
        %v265 = vsel %vm264, %v257, %v261
        %v266 = vand.u32 2147483647, %v255
        %vm267 = vcmp.eq.f32.partialorder %v266, 8.507059e+37
        %v268 = vand.u32 %v255, 2147483648
        %v269 = vor.u32 1.1754944e-38, %v268
        %v270 = vsel %vm267, %v269, %v265
        %v271 = vmul.f32 1.0, %v270
        %v272 = vrcp.pop %v256
        %v273 = vmul.f32 %v256, %v272
        %v274 = vsub.f32 1.0, %v273
        %v275 = vmul.f32 %v272, %v274
        %v276 = vadd.f32 %v272, %v275
        %vm277 = vweird.f32 %v256
        %vm278 = vweird.f32 %v272
        %vm279 = vmor %vm277, %vm278
        %v280 = vsel %vm279, %v272, %v276
        %v281 = vand.u32 2147483647, %v256
        %vm282 = vcmp.eq.f32.partialorder %v281, 8.507059e+37
        %v283 = vand.u32 %v256, 2147483648
        %v284 = vor.u32 1.1754944e-38, %v283
        %v285 = vsel %vm282, %v284, %v280
        %v286 = vmul.f32 1.0, %v285
        %288 = vset.pattern.permute.xlu0 0
        %289 = vperm.xlu0 %288, %v271
        %v290 = vpop.permute.xlu0 %289
        %293 = vset.pattern.permute.xlu0 0
        %294 = vperm.xlu0 %293, %v286
        %v295 = vpop.permute.xlu0 %294
        %v297 = vmul.f32 %v178, %v290
        %v298 = vmul.f32 %v179, %v290
        %v299 = vmul.f32 %v180, %v295
        %v300 = vmul.f32 %v181, %v295
        %301 = vst [vmem:[%s177] sm:$0xff] %v297
        %302 = vst [vmem:[%s177 + $0x8] sm:$0xff] %v298
        %303 = vst [vmem:[%s177 + $0x10] sm:$0xff] %v299
        %304 = vst [vmem:[%s177 + $0x18] sm:$0xff] %v300
        %s305 = sand.u32 %s75, 1
        %s306 = scalar_lea.sflag [#allocation4], %s305
        %s307 = sand.u32 %s75, 1
        %s308 = smul.addr %s307, 32
        %s309 = scalar_lea.vmem [#allocation7], %s308
        // Predicated region
        $region37: #{tpu_custom_call.1} parent=27 // pred_check
          %p310 = pneg %p85
        $region38: #{tpu_custom_call.1} parent=27 // pred_check_branch
          %312 = sbr.rel (%p310) target = $region40
        $region39: #{tpu_custom_call.1} parent=27 // pred_region
          %314 = vsyncadd %s306, 0
          %s315 = smul.addr %s20, 4
          %s316 = smul.addr %s315, 8
          %s317 = scalar_lea.hbm %s2, %s316
          %s318 = sshll.u32 %s309, 4
          %s319 = int_to_ptr.vmem [resolvable:$true] %s318
          %s320 = sshll.u32 %s317, 4
          %s321 = int_to_ptr.hbm [resolvable:$true] %s320
          %326 = dma.vmem_to_hbm [thread:$0]  %s319, 512, %s321, %s306, 256, 256, 16
        $region40: #{tpu_custom_call.1} parent=27 // pred_fallthru
          _
      $region28: #{tpu_custom_call.1} parent=5 // pred_fallthru
        _
      %p327 = scmp.le.s32.totalorder 2, %s15
      // Predicated region
      $region41: #{tpu_custom_call.1} parent=5 // pred_check
        %p328 = pneg %p327
      $region42: #{tpu_custom_call.1} parent=5 // pred_check_branch
        %330 = sbr.rel (%p328) target = $region44
      $region43: #{tpu_custom_call.1} parent=5 // pred_region
        %s331 = ssub.s32 %s15, 2
        // Predicated region
        $region45: #{tpu_custom_call.1} parent=43 // pred_check
          %p332 = pneg %p91
        $region46: #{tpu_custom_call.1} parent=43 // pred_check_branch
          %334 = sbr.rel (%p332) target = $region48
        $region47: #{tpu_custom_call.1} parent=43 // pred_region
          %s335 = sand.u32 %s76, 1
          %s336 = scalar_lea.sflag [#allocation4], %s335
          %s337 = sand.u32 %s76, 1
          %s338 = smul.addr %s337, 32
          %s339 = scalar_lea.vmem [#allocation7], %s338
          %341 = dma.done %s336, 512
        $region48: #{tpu_custom_call.1} parent=43 // pred_fallthru
          _
      $region44: #{tpu_custom_call.1} parent=5 // pred_fallthru
        _
    $region6: #{tpu_custom_call.1} parent=1 // loop_footer
      %s19 = sadd.s32 1, %s15
    $region7: #{tpu_custom_call.1} parent=1 // loop_footer_branch
      %14 = sbr.rel target = $region3
    $region8: #{tpu_custom_call.1} parent=1 // loop_exit
      _
    %342 = vsyncpa [#allocation3], 1
    %s343 = scalar_lea.sflag [#allocation3], 1
    %344 = vsyncpa %s343, 1
    %345 = vsyncpa [#allocation4], 1
    %s346 = scalar_lea.sflag [#allocation4], 1
    %347 = vsyncpa %s346, 1
    %348 = vsyncpa [#allocation5], 1
    %s349 = scalar_lea.sflag [#allocation5], 1
    %350 = vsyncpa %s349, 1

</llo_original>
